<compile_context>
chip_gen: v6e
topology: v6e:2x2x1
jax: 0.10.0
libtpu: 0.0.40
codegen_flags: <defaults>
</compile_context>

<pallas_src>
import jax
import jax.numpy as jnp
from jax import lax
from jax.experimental import pallas as pl
from jax.experimental.pallas import tpu as pltpu

EPS = 1e-5  # nn.LayerNorm default eps


def _prenorm_linear_kernel(x_ref, w_ref, b_ref, o_ref):
    # x_ref : (TM, D)  token tile, native dtype
    # w_ref : (D, D)   folded weight  diag(gamma) @ W^T   (native dtype, VMEM-resident)
    # b_ref : (1, D)   folded bias    beta @ W^T + wb     (f32, VMEM-resident)
    # o_ref : (TM, D)  output tile
    x = x_ref[...].astype(jnp.float32)  # LN stats in f32 on the VPU

    inv_d = jnp.float32(1.0 / x.shape[-1])
    mu = jnp.sum(x, axis=-1, keepdims=True) * inv_d
    xc = x - mu
    var = jnp.sum(xc * xc, axis=-1, keepdims=True) * inv_d
    xn = xc * lax.rsqrt(var + EPS)          # rsqrt -> EUP slot (free vs VALU)

    # MXU fast path: native-dtype operands (bf16 in production), f32 accumulate.
    y = jnp.dot(xn.astype(w_ref.dtype), w_ref[...],
                preferred_element_type=jnp.float32)
    o_ref[...] = (y + b_ref[...]).astype(o_ref.dtype)


def _pick_tile_rows(rows, itemsize):
    """Row-tile size: MXU/sublane aligned, big enough to amortize step overhead."""
    sublane = 16 if itemsize == 2 else 8
    if rows >= 512:
        return 512
    if rows >= 256:
        return 256
    if rows >= 128:
        return 128
    return max(sublane, ((rows + sublane - 1) // sublane) * sublane)


def prenorm_linear(x, gamma, beta, w_t, wb):
    """x: (B, N, D); w_t: (D, D) laid out so y = xn @ w_t (PyTorch W pre-transposed).

    Returns fn(LayerNorm(x)) with fn = Linear(D, D).
    """
    B, N, D = x.shape
    rows = B * N
    dtype = x.dtype

    # Fold LayerNorm affine into the Linear (wrapper-side, once):
    w32 = w_t.astype(jnp.float32)
    w_eff = (gamma.astype(jnp.float32)[:, None] * w32).astype(w_t.dtype)
    b_eff = (beta.astype(jnp.float32) @ w32
             + wb.astype(jnp.float32)).reshape(1, D)

    x2 = x.reshape(rows, D)
    tm = _pick_tile_rows(rows, jnp.dtype(dtype).itemsize)
    rows_p = pl.cdiv(rows, tm) * tm
    if rows_p != rows:
        # Zero-padded rows normalize to 0 (no NaNs) and are sliced off below.
        x2 = jnp.pad(x2, ((0, rows_p - rows), (0, 0)))

    # VMEM budget: double-buffered x/out tiles + resident weight/bias + f32 temps.
    # Only raise the scoped limit above the ~32 MiB default when the plan needs it.
    itm = jnp.dtype(dtype).itemsize
    itw = jnp.dtype(w_t.dtype).itemsize
    need = (2 * 2 * tm * D * itm          # double-buffered x and out tiles
            + D * D * itw + 4 * D         # resident folded weight + bias
            + 3 * tm * D * 4)             # f32 LN temporaries
    need = int(need * 1.5)
    cp_kwargs = dict(dimension_semantics=("parallel",))
    if need > 32 * 1024 * 1024:
        cp_kwargs["vmem_limit_bytes"] = need

    out2 = pl.pallas_call(
        _prenorm_linear_kernel,
        out_shape=jax.ShapeDtypeStruct((rows_p, D), dtype),
        grid_spec=pltpu.PrefetchScalarGridSpec(
            num_scalar_prefetch=0,
            grid=(rows_p // tm,),
            in_specs=[
                pl.BlockSpec((tm, D), lambda i: (i, 0)),   # x tile (pipelined)
                pl.BlockSpec((D, D), lambda i: (0, 0)),    # folded weight, resident
                pl.BlockSpec((1, D), lambda i: (0, 0)),    # folded bias, resident
            ],
            out_specs=pl.BlockSpec((tm, D), lambda i: (i, 0)),
        ),
        compiler_params=pltpu.CompilerParams(**cp_kwargs),
    )(x2, w_eff, b_eff)

    return out2[:rows].reshape(B, N, D)


def reference(x, gamma, beta, w_t, wb):
    x32 = x.astype(jnp.float32)
    mu = jnp.mean(x32, axis=-1, keepdims=True)
    var = jnp.mean((x32 - mu) ** 2, axis=-1, keepdims=True)
    xn = (x32 - mu) / jnp.sqrt(var + EPS)
    xn = xn * gamma.astype(jnp.float32) + beta.astype(jnp.float32)
    y = jnp.dot(xn, w_t.astype(jnp.float32),
                precision=lax.Precision.HIGHEST) + wb.astype(jnp.float32)
    return y.astype(x.dtype)


if __name__ == "__main__":
    # rows = 4*96 = 384 -> TM=256, grid of 2 tiles, last tile zero-padded.
    B, N, D = 4, 96, 128
    key = jax.random.PRNGKey(0)
    kx, kg, kb, kw, kwb = jax.random.split(key, 5)

    x = jax.random.normal(kx, (B, N, D), dtype=jnp.float32)

    # LayerNorm affine params (non-trivial so the gamma/beta fold is exercised).
    gamma = 1.0 + 0.1 * jax.random.normal(kg, (D,), dtype=jnp.float32)
    beta = 0.1 * jax.random.normal(kb, (D,), dtype=jnp.float32)

    # fn = Linear(D, D): PyTorch computes x @ W^T + b; pre-transpose W once.
    w_pt = jax.random.normal(kw, (D, D), dtype=jnp.float32) * 0.05  # (out, in)
    wb = jax.random.normal(kwb, (D,), dtype=jnp.float32) * 0.05
    w_t = w_pt.T                                                     # (in, out)

    out = prenorm_linear(x, gamma, beta, w_t, wb)
    out = jax.block_until_ready(out)

    ref = reference(x, gamma, beta, w_t, wb)
    assert out.shape == (B, N, D)
    err = jnp.max(jnp.abs(out.astype(jnp.float32) - ref.astype(jnp.float32)))
    assert err < 5e-3, f"mismatch vs reference: max abs err {err}"

    # TODO(synk): generic `fn` callables (e.g. attention) are not fused here;
    # only the Linear instantiation of fn is implemented.
    print("KERNEL_OK")
</pallas_src>

<mosaic_0001>
module attributes {stable_mosaic.version = 11 : i64} {
  func.func @_prenorm_linear_kernel(%arg0: i32, %arg1: memref<256x128xf32, #tpu.memory_space<vmem>>, %arg2: memref<128x128xf32, #tpu.memory_space<vmem>>, %arg3: memref<1x128xf32, #tpu.memory_space<vmem>>, %arg4: memref<256x128xf32, #tpu.memory_space<vmem>>) attributes {dimension_semantics = [#tpu.dimension_semantics<parallel>], iteration_bounds = array<i64: 2>, scalar_prefetch = 0 : i64, scratch_operands = 0 : i64, tpu.core_type = #tpu.core_type<tc>, window_params = [{transform_indices = @transform_0, window_bounds = array<i64: 256, 128>}, {pipeline_mode = #tpu.pipeline_mode<synchronous>, transform_indices = @transform_1, window_bounds = array<i64: 128, 128>}, {pipeline_mode = #tpu.pipeline_mode<synchronous>, transform_indices = @transform_2, window_bounds = array<i64: 1, 128>}, {transform_indices = @transform_3, window_bounds = array<i64: 256, 128>}]} {
    %c0 = arith.constant 0 : index
    %c0_0 = arith.constant 0 : index
    %0 = vector.load %arg1[%c0, %c0_0] : memref<256x128xf32, #tpu.memory_space<vmem>>, vector<256x128xf32>
    %cst = arith.constant dense<0.000000e+00> : vector<256xf32>
    %1 = vector.multi_reduction <add>, %0, %cst [1] : vector<256x128xf32> to vector<256xf32>
    %2 = vector.shape_cast %1 : vector<256xf32> to vector<256x1xf32>
    %cst_1 = arith.constant 7.812500e-03 : f32
    %3 = vector.broadcast %cst_1 : f32 to vector<256x1xf32>
    %4 = arith.mulf %2, %3 : vector<256x1xf32>
    %5 = vector.broadcast %4 : vector<256x1xf32> to vector<256x128xf32>
    %6 = arith.subf %0, %5 : vector<256x128xf32>
    %7 = arith.mulf %6, %6 : vector<256x128xf32>
    %cst_2 = arith.constant dense<0.000000e+00> : vector<256xf32>
    %8 = vector.multi_reduction <add>, %7, %cst_2 [1] : vector<256x128xf32> to vector<256xf32>
    %9 = vector.shape_cast %8 : vector<256xf32> to vector<256x1xf32>
    %cst_3 = arith.constant 7.812500e-03 : f32
    %10 = vector.broadcast %cst_3 : f32 to vector<256x1xf32>
    %11 = arith.mulf %9, %10 : vector<256x1xf32>
    %cst_4 = arith.constant 9.99999974E-6 : f32
    %12 = vector.broadcast %cst_4 : f32 to vector<256x1xf32>
    %13 = arith.addf %11, %12 : vector<256x1xf32>
    %14 = math.rsqrt %13 : vector<256x1xf32>
    %15 = vector.broadcast %14 : vector<256x1xf32> to vector<256x128xf32>
    %16 = arith.mulf %6, %15 : vector<256x128xf32>
    %c0_5 = arith.constant 0 : index
    %c0_6 = arith.constant 0 : index
    %17 = vector.load %arg2[%c0_5, %c0_6] : memref<128x128xf32, #tpu.memory_space<vmem>>, vector<128x128xf32>
    %cst_7 = arith.constant dense<0.000000e+00> : vector<256x128xf32>
    %18 = tpu.matmul %16, %17, %cst_7 {dimension_numbers = #tpu.dot_dimension_numbers<[1], [0], [0], [1], [0, 0, 1, 1], [], []>} : vector<256x128xf32>, vector<128x128xf32>, vector<256x128xf32> -> vector<256x128xf32>
    %c0_8 = arith.constant 0 : index
    %c0_9 = arith.constant 0 : index
    %19 = vector.load %arg3[%c0_8, %c0_9] : memref<1x128xf32, #tpu.memory_space<vmem>>, vector<1x128xf32>
    %20 = vector.broadcast %19 : vector<1x128xf32> to vector<256x128xf32>
    %21 = arith.addf %18, %20 : vector<256x128xf32>
    %c0_10 = arith.constant 0 : index
    %c0_11 = arith.constant 0 : index
    %22 = vector.load %arg4[%c0_10, %c0_11] : memref<256x128xf32, #tpu.memory_space<vmem>>, vector<256x128xf32>
    tpu.vector_store %arg4[%c0_10, %c0_11], %21 {strides = array<i32>} : memref<256x128xf32, #tpu.memory_space<vmem>>, vector<256x128xf32>,
    return
  }
  func.func @transform_0(%arg0: i32) -> (i32, i32) {
    %c0_i32 = arith.constant 0 : i32
    %c0_i32_0 = arith.constant 0 : i32
    return %arg0, %c0_i32 : i32, i32
  }
  func.func @transform_1(%arg0: i32) -> (i32, i32) {
    %c0_i32 = arith.constant 0 : i32
    %c0_i32_0 = arith.constant 0 : i32
    %c0_i32_1 = arith.constant 0 : i32
    return %c0_i32, %c0_i32_0 : i32, i32
  }
  func.func @transform_2(%arg0: i32) -> (i32, i32) {
    %c0_i32 = arith.constant 0 : i32
    %c0_i32_0 = arith.constant 0 : i32
    %c0_i32_1 = arith.constant 0 : i32
    return %c0_i32, %c0_i32_0 : i32, i32
  }
  func.func @transform_3(%arg0: i32) -> (i32, i32) {
    %c0_i32 = arith.constant 0 : i32
    %c0_i32_0 = arith.constant 0 : i32
    return %arg0, %c0_i32 : i32, i32
  }
}

</mosaic_0001>

<llo_original>
// kernel: tpu_custom_call.1
$region0: #{tpu_custom_call.1}
  #allocation0 [shape = 'u32[]', space=smem, size = 0x4, offset = 0x4, fixed_abs, tag = 'smem constant byte address 0x4 - core index']
  #allocation1 [shape = 'u32[144,128]{1,0:T(1,128)}', space=vmem, size = 0x12000, scoped, tag = 'internal scratch']
  %s0 = inlined_call_operand.hbm [shape: f32[512,128], index: 0, kind: input, shape index: {}]
  %s1 = inlined_call_operand.hbm [shape: f32[128,128], index: 1, kind: input, shape index: {}]
  %s2 = inlined_call_operand.vmem [shape: f32[1,128], index: 2, kind: input, shape index: {}]
  %s3 = inlined_call_operand.hbm [shape: f32[512,128], index: 3, kind: output, shape index: {}]
  %s4 = sld [smem:[#allocation0]]
  $region53: #{tpu_custom_call.1} parent=0
    _
  %s6 = ssub.s32 1, %s4
  %s7 = scalar_select 0, %s6, %s4
  $region1: #{tpu_custom_call.1} parent=0
    #allocation2 [shape = 'u8[262144]{0}', space=vmem, size = 0x40000, scoped, tag = 'input window, operand 0']
    #allocation3 [shape = 's32[2]{0}', space=sflag, size = 0x8, scoped, tag = 'scoped memory for tpu_custom_call.1']
    #allocation4 [shape = 's32[2]{0}', space=sflag, size = 0x8, scoped, tag = 'scoped memory for tpu_custom_call.1']
    #allocation5 [shape = 'u8[65536]{0}', space=vmem, size = 0x10000, scoped, tag = 'input window, operand 1, single buffered']
    #allocation6 [shape = 's32[1]{0}', space=sflag, size = 0x4, scoped, tag = 'scoped memory for tpu_custom_call.1']
    #allocation7 [shape = 'u8[262144]{0}', space=vmem, size = 0x40000, scoped, tag = 'output window, operand 0']
    %8 = vsyncpa [#allocation3], 0
    %s9 = scalar_lea.sflag [#allocation3], 1
    %10 = vsyncpa %s9, 0
    %11 = vsyncpa [#allocation6], 0
    %12 = vsyncpa [#allocation4], 0
    %s13 = scalar_lea.sflag [#allocation4], 1
    %14 = vsyncpa %s13, 0
    loop: start=0, step=1, limit=4
    $region2: #{tpu_custom_call.1} parent=1 // loop_pre_header
      _
    $region3: #{tpu_custom_call.1} parent=1 // loop_header
      %s16 = sphi 0, %s20
      %p17 = scmp.ge.s32.totalorder %s16, 4
      %s26 = sphi 0, %s28
      %s29 = sphi 0, %s26
      %s30 = sphi 0, %s29
      %s46 = sphi 0, %s30
      %s50 = sphi 0, %s50
      %s52 = sphi 0, %s50
      %s53 = sphi 0, %s52
      %s67 = sphi 0, %s53
      %s71 = sphi 0, %s71
      %s73 = sphi 0, %s71
      %s74 = sphi 0, %s73
      %s88 = sphi 0, %s74
      %s94 = sphi 0, %s96
      %s97 = sphi 0, %s94
      %s98 = sphi 0, %s97
      %s114 = sphi 0, %s98
    $region4: #{tpu_custom_call.1} parent=1 // loop_header_branch
      %19 = sbr.rel (%p17) target = $region8
    $region5: #{tpu_custom_call.1} parent=1 // loop_body
      %s21 = ssub.s32 %s16, 1
      %s22 = ssub.s32 %s16, 2
      %s23 = sadd.s32 %s16, 1
      %s24 = ssub.s32 %s16, %s23
      %p25 = scmp.eq.s32.totalorder %s24, 0
      %s27 = sadd.s32 %s26, 1
      %s28 = scalar_select %p25, %s26, %s27
      %p31 = pneg %p25
      %p32 = scmp.eq.s32.totalorder %s16, 1
      %p33 = por %p31, %p32
      %p34 = scmp.ne.s32.totalorder %s26, %s29
      %p35 = scmp.eq.s32.totalorder %s16, 0
      %p36 = por %p34, %p35
      %p37 = scmp.ne.s32.totalorder %s26, %s29
      %p38 = scmp.eq.s32.totalorder %s21, 1
      %p39 = por %p37, %p38
      %p40 = scmp.ne.s32.totalorder %s29, %s30
      %p41 = scmp.eq.s32.totalorder %s21, 0
      %p42 = por %p40, %p41
      %p43 = scmp.ne.s32.totalorder %s29, %s30
      %p44 = scmp.eq.s32.totalorder %s22, 1
      %p45 = por %p43, %p44
      %p47 = scmp.ne.s32.totalorder %s30, %s46
      %p48 = scmp.eq.s32.totalorder %s22, 0
      %p49 = por %p47, %p48
      %s51 = sadd.s32 %s50, 1
      %p54 = scmp.eq.s32.totalorder %s16, 1
      %p55 = scmp.ne.s32.totalorder %s50, %s52
      %p56 = scmp.eq.s32.totalorder %s16, 0
      %p57 = por %p55, %p56
      %p58 = scmp.ne.s32.totalorder %s50, %s52
      %p59 = scmp.eq.s32.totalorder %s21, 1
      %p60 = por %p58, %p59
      %p61 = scmp.ne.s32.totalorder %s52, %s53
      %p62 = scmp.eq.s32.totalorder %s21, 0
      %p63 = por %p61, %p62
      %p64 = scmp.ne.s32.totalorder %s52, %s53
      %p65 = scmp.eq.s32.totalorder %s22, 1
      %p66 = por %p64, %p65
      %p68 = scmp.ne.s32.totalorder %s53, %s67
      %p69 = scmp.eq.s32.totalorder %s22, 0
      %p70 = por %p68, %p69
      %s72 = sadd.s32 %s71, 1
      %p75 = scmp.eq.s32.totalorder %s16, 1
      %p76 = scmp.ne.s32.totalorder %s71, %s73
      %p77 = scmp.eq.s32.totalorder %s16, 0
      %p78 = por %p76, %p77
      %p79 = scmp.ne.s32.totalorder %s71, %s73
      %p80 = scmp.eq.s32.totalorder %s21, 1
      %p81 = por %p79, %p80
      %p82 = scmp.ne.s32.totalorder %s73, %s74
      %p83 = scmp.eq.s32.totalorder %s21, 0
      %p84 = por %p82, %p83
      %p85 = scmp.ne.s32.totalorder %s73, %s74
      %p86 = scmp.eq.s32.totalorder %s22, 1
      %p87 = por %p85, %p86
      %p89 = scmp.ne.s32.totalorder %s74, %s88
      %p90 = scmp.eq.s32.totalorder %s22, 0
      %p91 = por %p89, %p90
      %s92 = ssub.s32 %s16, %s23
      %p93 = scmp.eq.s32.totalorder %s92, 0
      %s95 = sadd.s32 %s94, 1
      %s96 = scalar_select %p93, %s94, %s95
      %p99 = pneg %p93
      %p100 = scmp.eq.s32.totalorder %s16, 1
      %p101 = por %p99, %p100
      %p102 = scmp.ne.s32.totalorder %s94, %s97
      %p103 = scmp.eq.s32.totalorder %s16, 0
      %p104 = por %p102, %p103
      %p105 = scmp.ne.s32.totalorder %s94, %s97
      %p106 = scmp.eq.s32.totalorder %s21, 1
      %p107 = por %p105, %p106
      %p108 = scmp.ne.s32.totalorder %s97, %s98
      %p109 = scmp.eq.s32.totalorder %s21, 0
      %p110 = por %p108, %p109
      %p111 = scmp.ne.s32.totalorder %s97, %s98
      %p112 = scmp.eq.s32.totalorder %s22, 1
      %p113 = por %p111, %p112
      %p115 = scmp.ne.s32.totalorder %s98, %s114
      %p116 = scmp.eq.s32.totalorder %s22, 0
      %p117 = por %p115, %p116
      %p118 = scmp.le.s32.totalorder 1, %s16
      %p119 = scmp.lt.s32.totalorder %s16, 3
      %p120 = pnand %p118, %p119
      %p121 = pneg %p120
      // Predicated region
      $region9: #{tpu_custom_call.1} parent=5 // pred_check
        _
      $region10: #{tpu_custom_call.1} parent=5 // pred_check_branch
        %123 = sbr.rel (%p120) target = $region12
      $region11: #{tpu_custom_call.1} parent=5 // pred_region
        %s124 = ssub.s32 %s16, 1
        // Predicated region
        $region13: #{tpu_custom_call.1} parent=11 // pred_check
          %p125 = pneg %p63
        $region14: #{tpu_custom_call.1} parent=11 // pred_check_branch
          %127 = sbr.rel (%p125) target = $region16
        $region15: #{tpu_custom_call.1} parent=11 // pred_region
          %s129 = ssub.s32 2048, 2048
          %130 = vsyncadd [#allocation6], %s129
          %s131 = sshll.u32 [#allocation5], 4
          %s132 = int_to_ptr.vmem [resolvable:$true] %s131
          %137 = dma.hbm_to_vmem [thread:$0]  %s1, 2048, %s132, [#allocation6], 128, 128, 8
        $region16: #{tpu_custom_call.1} parent=11 // pred_fallthru
          _
        // Predicated region
        $region17: #{tpu_custom_call.1} parent=11 // pred_check
          %p138 = pneg %p84
        $region18: #{tpu_custom_call.1} parent=11 // pred_check_branch
          %140 = sbr.rel (%p138) target = $region20
        $region19: #{tpu_custom_call.1} parent=11 // pred_region
          _
        $region20: #{tpu_custom_call.1} parent=11 // pred_fallthru
          _
      $region12: #{tpu_custom_call.1} parent=5 // pred_fallthru
        _
      %p141 = scmp.lt.s32.totalorder %s16, 2
      // Predicated region
      $region21: #{tpu_custom_call.1} parent=5 // pred_check
        %p142 = pneg %p141
      $region22: #{tpu_custom_call.1} parent=5 // pred_check_branch
        %144 = sbr.rel (%p142) target = $region24
      $region23: #{tpu_custom_call.1} parent=5 // pred_region
        // Predicated region
        $region25: #{tpu_custom_call.1} parent=23 // pred_check
          %p145 = pneg %p36
        $region26: #{tpu_custom_call.1} parent=23 // pred_check_branch
          %147 = sbr.rel (%p145) target = $region28
        $region27: #{tpu_custom_call.1} parent=23 // pred_region
          %s148 = sand.u32 %s26, 1
          %s149 = scalar_lea.sflag [#allocation3], %s148
          %s150 = sand.u32 %s26, 1
          %s151 = smul.addr %s150, 256
          %s152 = scalar_lea.vmem [#allocation2], %s151
          %s153 = smul.u32 32, %s16
          %s155 = ssub.s32 4096, 4096
          %156 = vsyncadd %s149, %s155
          %s157 = smul.addr %s153, 128
          %s158 = scalar_lea.hbm %s0, %s157
          %s159 = sshll.u32 %s152, 4
          %s160 = int_to_ptr.vmem [resolvable:$true] %s159
          %165 = dma.hbm_to_vmem [thread:$0]  %s158, 4096, %s160, %s149, 128, 128, 8
        $region28: #{tpu_custom_call.1} parent=23 // pred_fallthru
          _
      $region24: #{tpu_custom_call.1} parent=5 // pred_fallthru
        _
      %p166 = scmp.le.s32.totalorder 1, %s16
      %p167 = scmp.lt.s32.totalorder %s16, 3
      %p168 = pnand %p166, %p167
      %p169 = pneg %p168
      // Predicated region
      $region29: #{tpu_custom_call.1} parent=5 // pred_check
        _
      $region30: #{tpu_custom_call.1} parent=5 // pred_check_branch
        %171 = sbr.rel (%p168) target = $region32
      $region31: #{tpu_custom_call.1} parent=5 // pred_region
        %s172 = ssub.s32 %s16, 1
        %s173 = sand.u32 %s29, 1
        %s174 = scalar_lea.sflag [#allocation3], %s173
        %s175 = sand.u32 %s29, 1
        %s176 = smul.addr %s175, 256
        %s177 = scalar_lea.vmem [#allocation2], %s176
        // Predicated region
        $region33: #{tpu_custom_call.1} parent=31 // pred_check
          %p178 = pneg %p42
        $region34: #{tpu_custom_call.1} parent=31 // pred_check_branch
          %180 = sbr.rel (%p178) target = $region36
        $region35: #{tpu_custom_call.1} parent=31 // pred_region
          %181 = dma.done %s174, 4096
        $region36: #{tpu_custom_call.1} parent=31 // pred_fallthru
          _
        // Predicated region
        $region37: #{tpu_custom_call.1} parent=31 // pred_check
          %p182 = pneg %p63
        $region38: #{tpu_custom_call.1} parent=31 // pred_check_branch
          %184 = sbr.rel (%p182) target = $region40
        $region39: #{tpu_custom_call.1} parent=31 // pred_region
          %185 = dma.done [#allocation6], 2048
        $region40: #{tpu_custom_call.1} parent=31 // pred_fallthru
          _
        %s186 = sand.u32 %s29, 1
        %s187 = scalar_lea.sflag [#allocation3], %s186
        %s188 = sand.u32 %s29, 1
        %s189 = smul.addr %s188, 256
        %s190 = scalar_lea.vmem [#allocation2], %s189
        %p191 = pneg %p42
        %p192 = pneg %p39
        %p193 = pneg %p63
        %p194 = pneg %p60
        %p195 = pneg %p84
        %p196 = pneg %p81
        %p197 = pneg %p110
        %p198 = pneg %p107
        %s199 = sand.u32 %s97, 1
        %s200 = scalar_lea.sflag [#allocation4], %s199
        %s201 = sand.u32 %s97, 1
        %s202 = smul.addr %s201, 256
        %s203 = scalar_lea.vmem [#allocation7], %s202
        %s204 = smul.u32 32, %s21
        %s205 = smul.u32 32, %s21
        %v206 = vld [vmem:[%s177] sm:$0xff]
        %v207 = vld [vmem:[%s177 + $0x8] sm:$0xff]
        %v208 = vld [vmem:[%s177 + $0x10] sm:$0xff]
        %v209 = vld [vmem:[%s177 + $0x18] sm:$0xff]
        %v210 = vld [vmem:[%s177 + $0x20] sm:$0xff]
        %v211 = vld [vmem:[%s177 + $0x28] sm:$0xff]
        %v212 = vld [vmem:[%s177 + $0x30] sm:$0xff]
        %v213 = vld [vmem:[%s177 + $0x38] sm:$0xff]
        %v214 = vld [vmem:[%s177 + $0x40] sm:$0xff]
        %v215 = vld [vmem:[%s177 + $0x48] sm:$0xff]
        %v216 = vld [vmem:[%s177 + $0x50] sm:$0xff]
        %v217 = vld [vmem:[%s177 + $0x58] sm:$0xff]
        %v218 = vld [vmem:[%s177 + $0x60] sm:$0xff]
        %v219 = vld [vmem:[%s177 + $0x68] sm:$0xff]
        %v220 = vld [vmem:[%s177 + $0x70] sm:$0xff]
        %v221 = vld [vmem:[%s177 + $0x78] sm:$0xff]
        %v222 = vld [vmem:[%s177 + $0x80] sm:$0xff]
        %v223 = vld [vmem:[%s177 + $0x88] sm:$0xff]
        %v224 = vld [vmem:[%s177 + $0x90] sm:$0xff]
        %v225 = vld [vmem:[%s177 + $0x98] sm:$0xff]
        %v226 = vld [vmem:[%s177 + $0xa0] sm:$0xff]
        %v227 = vld [vmem:[%s177 + $0xa8] sm:$0xff]
        %v228 = vld [vmem:[%s177 + $0xb0] sm:$0xff]
        %v229 = vld [vmem:[%s177 + $0xb8] sm:$0xff]
        %v230 = vld [vmem:[%s177 + $0xc0] sm:$0xff]
        %v231 = vld [vmem:[%s177 + $0xc8] sm:$0xff]
        %v232 = vld [vmem:[%s177 + $0xd0] sm:$0xff]
        %v233 = vld [vmem:[%s177 + $0xd8] sm:$0xff]
        %v234 = vld [vmem:[%s177 + $0xe0] sm:$0xff]
        %v235 = vld [vmem:[%s177 + $0xe8] sm:$0xff]
        %v236 = vld [vmem:[%s177 + $0xf0] sm:$0xff]
        %v237 = vld [vmem:[%s177 + $0xf8] sm:$0xff]
        %238 = vadd.xlane.f32.xlu0 %v206
        %v239 = vpop.xlane.xlu0 %238
        %240 = vadd.xlane.f32.xlu0 %v207
        %v241 = vpop.xlane.xlu0 %240
        %242 = vadd.xlane.f32.xlu0 %v208
        %v243 = vpop.xlane.xlu0 %242
        %244 = vadd.xlane.f32.xlu0 %v209
        %v245 = vpop.xlane.xlu0 %244
        %246 = vadd.xlane.f32.xlu0 %v210
        %v247 = vpop.xlane.xlu0 %246
        %248 = vadd.xlane.f32.xlu0 %v211
        %v249 = vpop.xlane.xlu0 %248
        %250 = vadd.xlane.f32.xlu0 %v212
        %v251 = vpop.xlane.xlu0 %250
        %252 = vadd.xlane.f32.xlu0 %v213
        %v253 = vpop.xlane.xlu0 %252
        %254 = vadd.xlane.f32.xlu0 %v214
        %v255 = vpop.xlane.xlu0 %254
        %256 = vadd.xlane.f32.xlu0 %v215
        %v257 = vpop.xlane.xlu0 %256
        %258 = vadd.xlane.f32.xlu0 %v216
        %v259 = vpop.xlane.xlu0 %258
        %260 = vadd.xlane.f32.xlu0 %v217
        %v261 = vpop.xlane.xlu0 %260
        %262 = vadd.xlane.f32.xlu0 %v218
        %v263 = vpop.xlane.xlu0 %262
        %264 = vadd.xlane.f32.xlu0 %v219
        %v265 = vpop.xlane.xlu0 %264
        %266 = vadd.xlane.f32.xlu0 %v220
        %v267 = vpop.xlane.xlu0 %266
        %268 = vadd.xlane.f32.xlu0 %v221
        %v269 = vpop.xlane.xlu0 %268
        %270 = vadd.xlane.f32.xlu0 %v222
        %v271 = vpop.xlane.xlu0 %270
        %272 = vadd.xlane.f32.xlu0 %v223
        %v273 = vpop.xlane.xlu0 %272
        %274 = vadd.xlane.f32.xlu0 %v224
        %v275 = vpop.xlane.xlu0 %274
        %276 = vadd.xlane.f32.xlu0 %v225
        %v277 = vpop.xlane.xlu0 %276
        %278 = vadd.xlane.f32.xlu0 %v226
        %v279 = vpop.xlane.xlu0 %278
        %280 = vadd.xlane.f32.xlu0 %v227
        %v281 = vpop.xlane.xlu0 %280
        %282 = vadd.xlane.f32.xlu0 %v228
        %v283 = vpop.xlane.xlu0 %282
        %284 = vadd.xlane.f32.xlu0 %v229
        %v285 = vpop.xlane.xlu0 %284
        %286 = vadd.xlane.f32.xlu0 %v230
        %v287 = vpop.xlane.xlu0 %286
        %288 = vadd.xlane.f32.xlu0 %v231
        %v289 = vpop.xlane.xlu0 %288
        %290 = vadd.xlane.f32.xlu0 %v232
        %v291 = vpop.xlane.xlu0 %290
        %292 = vadd.xlane.f32.xlu0 %v233
        %v293 = vpop.xlane.xlu0 %292
        %294 = vadd.xlane.f32.xlu0 %v234
        %v295 = vpop.xlane.xlu0 %294
        %296 = vadd.xlane.f32.xlu0 %v235
        %v297 = vpop.xlane.xlu0 %296
        %298 = vadd.xlane.f32.xlu0 %v236
        %v299 = vpop.xlane.xlu0 %298
        %300 = vadd.xlane.f32.xlu0 %v237
        %v301 = vpop.xlane.xlu0 %300
        %v302 = vmul.f32 %v239, 0.0078125
        %v303 = vmul.f32 %v241, 0.0078125
        %v304 = vmul.f32 %v243, 0.0078125
        %v305 = vmul.f32 %v245, 0.0078125
        %v306 = vmul.f32 %v247, 0.0078125
        %v307 = vmul.f32 %v249, 0.0078125
        %v308 = vmul.f32 %v251, 0.0078125
        %v309 = vmul.f32 %v253, 0.0078125
        %v310 = vmul.f32 %v255, 0.0078125
        %v311 = vmul.f32 %v257, 0.0078125
        %v312 = vmul.f32 %v259, 0.0078125
        %v313 = vmul.f32 %v261, 0.0078125
        %v314 = vmul.f32 %v263, 0.0078125
        %v315 = vmul.f32 %v265, 0.0078125
        %v316 = vmul.f32 %v267, 0.0078125
        %v317 = vmul.f32 %v269, 0.0078125
        %v318 = vmul.f32 %v271, 0.0078125
        %v319 = vmul.f32 %v273, 0.0078125
        %v320 = vmul.f32 %v275, 0.0078125
        %v321 = vmul.f32 %v277, 0.0078125
        %v322 = vmul.f32 %v279, 0.0078125
        %v323 = vmul.f32 %v281, 0.0078125
        %v324 = vmul.f32 %v283, 0.0078125
        %v325 = vmul.f32 %v285, 0.0078125
        %v326 = vmul.f32 %v287, 0.0078125
        %v327 = vmul.f32 %v289, 0.0078125
        %v328 = vmul.f32 %v291, 0.0078125
        %v329 = vmul.f32 %v293, 0.0078125
        %v330 = vmul.f32 %v295, 0.0078125
        %v331 = vmul.f32 %v297, 0.0078125
        %v332 = vmul.f32 %v299, 0.0078125
        %v333 = vmul.f32 %v301, 0.0078125
        %v334 = vsub.f32 %v206, %v302
        %v335 = vsub.f32 %v207, %v303
        %v336 = vsub.f32 %v208, %v304
        %v337 = vsub.f32 %v209, %v305
        %v338 = vsub.f32 %v210, %v306
        %v339 = vsub.f32 %v211, %v307
        %v340 = vsub.f32 %v212, %v308
        %v341 = vsub.f32 %v213, %v309
        %v342 = vsub.f32 %v214, %v310
        %v343 = vsub.f32 %v215, %v311
        %v344 = vsub.f32 %v216, %v312
        %v345 = vsub.f32 %v217, %v313
        %v346 = vsub.f32 %v218, %v314
        %v347 = vsub.f32 %v219, %v315
        %v348 = vsub.f32 %v220, %v316
        %v349 = vsub.f32 %v221, %v317
        %v350 = vsub.f32 %v222, %v318
        %v351 = vsub.f32 %v223, %v319
        %v352 = vsub.f32 %v224, %v320
        %v353 = vsub.f32 %v225, %v321
        %v354 = vsub.f32 %v226, %v322
        %v355 = vsub.f32 %v227, %v323
        %v356 = vsub.f32 %v228, %v324
        %v357 = vsub.f32 %v229, %v325
        %v358 = vsub.f32 %v230, %v326
        %v359 = vsub.f32 %v231, %v327
        %v360 = vsub.f32 %v232, %v328
        %v361 = vsub.f32 %v233, %v329
        %v362 = vsub.f32 %v234, %v330
        %v363 = vsub.f32 %v235, %v331
        %v364 = vsub.f32 %v236, %v332
        %v365 = vsub.f32 %v237, %v333
        %v366 = vmul.f32 %v334, %v334
        %v367 = vmul.f32 %v335, %v335
        %v368 = vmul.f32 %v336, %v336
        %v369 = vmul.f32 %v337, %v337
        %v370 = vmul.f32 %v338, %v338
        %v371 = vmul.f32 %v339, %v339
        %v372 = vmul.f32 %v340, %v340
        %v373 = vmul.f32 %v341, %v341
        %v374 = vmul.f32 %v342, %v342
        %v375 = vmul.f32 %v343, %v343
        %v376 = vmul.f32 %v344, %v344
        %v377 = vmul.f32 %v345, %v345
        %v378 = vmul.f32 %v346, %v346
        %v379 = vmul.f32 %v347, %v347
        %v380 = vmul.f32 %v348, %v348
        %v381 = vmul.f32 %v349, %v349
        %v382 = vmul.f32 %v350, %v350
        %v383 = vmul.f32 %v351, %v351
        %v384 = vmul.f32 %v352, %v352
        %v385 = vmul.f32 %v353, %v353
        %v386 = vmul.f32 %v354, %v354
        %v387 = vmul.f32 %v355, %v355
        %v388 = vmul.f32 %v356, %v356
        %v389 = vmul.f32 %v357, %v357
        %v390 = vmul.f32 %v358, %v358
        %v391 = vmul.f32 %v359, %v359
        %v392 = vmul.f32 %v360, %v360
        %v393 = vmul.f32 %v361, %v361
        %v394 = vmul.f32 %v362, %v362
        %v395 = vmul.f32 %v363, %v363
        %v396 = vmul.f32 %v364, %v364
        %v397 = vmul.f32 %v365, %v365
        %398 = vadd.xlane.f32.xlu0 %v366
        %v399 = vpop.xlane.xlu0 %398
        %400 = vadd.xlane.f32.xlu0 %v367
        %v401 = vpop.xlane.xlu0 %400
        %402 = vadd.xlane.f32.xlu0 %v368
        %v403 = vpop.xlane.xlu0 %402
        %404 = vadd.xlane.f32.xlu0 %v369
        %v405 = vpop.xlane.xlu0 %404
        %406 = vadd.xlane.f32.xlu0 %v370
        %v407 = vpop.xlane.xlu0 %406
        %408 = vadd.xlane.f32.xlu0 %v371
        %v409 = vpop.xlane.xlu0 %408
        %410 = vadd.xlane.f32.xlu0 %v372
        %v411 = vpop.xlane.xlu0 %410
        %412 = vadd.xlane.f32.xlu0 %v373
        %v413 = vpop.xlane.xlu0 %412
        %414 = vadd.xlane.f32.xlu0 %v374
        %v415 = vpop.xlane.xlu0 %414
        %416 = vadd.xlane.f32.xlu0 %v375
        %v417 = vpop.xlane.xlu0 %416
        %418 = vadd.xlane.f32.xlu0 %v376
        %v419 = vpop.xlane.xlu0 %418
        %420 = vadd.xlane.f32.xlu0 %v377
        %v421 = vpop.xlane.xlu0 %420
        %422 = vadd.xlane.f32.xlu0 %v378
        %v423 = vpop.xlane.xlu0 %422
        %424 = vadd.xlane.f32.xlu0 %v379
        %v425 = vpop.xlane.xlu0 %424
        %426 = vadd.xlane.f32.xlu0 %v380
        %v427 = vpop.xlane.xlu0 %426
        %428 = vadd.xlane.f32.xlu0 %v381
        %v429 = vpop.xlane.xlu0 %428
        %430 = vadd.xlane.f32.xlu0 %v382
        %v431 = vpop.xlane.xlu0 %430
        %432 = vadd.xlane.f32.xlu0 %v383
        %v433 = vpop.xlane.xlu0 %432
        %434 = vadd.xlane.f32.xlu0 %v384
        %v435 = vpop.xlane.xlu0 %434
        %436 = vadd.xlane.f32.xlu0 %v385
        %v437 = vpop.xlane.xlu0 %436
        %438 = vadd.xlane.f32.xlu0 %v386
        %v439 = vpop.xlane.xlu0 %438
        %440 = vadd.xlane.f32.xlu0 %v387
        %v441 = vpop.xlane.xlu0 %440
        %442 = vadd.xlane.f32.xlu0 %v388
        %v443 = vpop.xlane.xlu0 %442
        %444 = vadd.xlane.f32.xlu0 %v389
        %v445 = vpop.xlane.xlu0 %444
        %446 = vadd.xlane.f32.xlu0 %v390
        %v447 = vpop.xlane.xlu0 %446
        %448 = vadd.xlane.f32.xlu0 %v391
        %v449 = vpop.xlane.xlu0 %448
        %450 = vadd.xlane.f32.xlu0 %v392
        %v451 = vpop.xlane.xlu0 %450
        %452 = vadd.xlane.f32.xlu0 %v393
        %v453 = vpop.xlane.xlu0 %452
        %454 = vadd.xlane.f32.xlu0 %v394
        %v455 = vpop.xlane.xlu0 %454
        %456 = vadd.xlane.f32.xlu0 %v395
        %v457 = vpop.xlane.xlu0 %456
        %458 = vadd.xlane.f32.xlu0 %v396
        %v459 = vpop.xlane.xlu0 %458
        %460 = vadd.xlane.f32.xlu0 %v397
        %v461 = vpop.xlane.xlu0 %460
        %v462 = vmul.f32 %v399, 0.0078125
        %v463 = vmul.f32 %v401, 0.0078125
        %v464 = vmul.f32 %v403, 0.0078125
        %v465 = vmul.f32 %v405, 0.0078125
        %v466 = vmul.f32 %v407, 0.0078125
        %v467 = vmul.f32 %v409, 0.0078125
        %v468 = vmul.f32 %v411, 0.0078125
        %v469 = vmul.f32 %v413, 0.0078125
        %v470 = vmul.f32 %v415, 0.0078125
        %v471 = vmul.f32 %v417, 0.0078125
        %v472 = vmul.f32 %v419, 0.0078125
        %v473 = vmul.f32 %v421, 0.0078125
        %v474 = vmul.f32 %v423, 0.0078125
        %v475 = vmul.f32 %v425, 0.0078125
        %v476 = vmul.f32 %v427, 0.0078125
        %v477 = vmul.f32 %v429, 0.0078125
        %v478 = vmul.f32 %v431, 0.0078125
        %v479 = vmul.f32 %v433, 0.0078125
        %v480 = vmul.f32 %v435, 0.0078125
        %v481 = vmul.f32 %v437, 0.0078125
        %v482 = vmul.f32 %v439, 0.0078125
        %v483 = vmul.f32 %v441, 0.0078125
        %v484 = vmul.f32 %v443, 0.0078125
        %v485 = vmul.f32 %v445, 0.0078125
        %v486 = vmul.f32 %v447, 0.0078125
        %v487 = vmul.f32 %v449, 0.0078125
        %v488 = vmul.f32 %v451, 0.0078125
        %v489 = vmul.f32 %v453, 0.0078125
        %v490 = vmul.f32 %v455, 0.0078125
        %v491 = vmul.f32 %v457, 0.0078125
        %v492 = vmul.f32 %v459, 0.0078125
        %v493 = vmul.f32 %v461, 0.0078125
        %v494 = vadd.f32 %v462, 1e-05
        %v495 = vadd.f32 %v463, 1e-05
        %v496 = vadd.f32 %v464, 1e-05
        %v497 = vadd.f32 %v465, 1e-05
        %v498 = vadd.f32 %v466, 1e-05
        %v499 = vadd.f32 %v467, 1e-05
        %v500 = vadd.f32 %v468, 1e-05
        %v501 = vadd.f32 %v469, 1e-05
        %v502 = vadd.f32 %v470, 1e-05
        %v503 = vadd.f32 %v471, 1e-05
        %v504 = vadd.f32 %v472, 1e-05
        %v505 = vadd.f32 %v473, 1e-05
        %v506 = vadd.f32 %v474, 1e-05
        %v507 = vadd.f32 %v475, 1e-05
        %v508 = vadd.f32 %v476, 1e-05
        %v509 = vadd.f32 %v477, 1e-05
        %v510 = vadd.f32 %v478, 1e-05
        %v511 = vadd.f32 %v479, 1e-05
        %v512 = vadd.f32 %v480, 1e-05
        %v513 = vadd.f32 %v481, 1e-05
        %v514 = vadd.f32 %v482, 1e-05
        %v515 = vadd.f32 %v483, 1e-05
        %v516 = vadd.f32 %v484, 1e-05
        %v517 = vadd.f32 %v485, 1e-05
        %v518 = vadd.f32 %v486, 1e-05
        %v519 = vadd.f32 %v487, 1e-05
        %v520 = vadd.f32 %v488, 1e-05
        %v521 = vadd.f32 %v489, 1e-05
        %v522 = vadd.f32 %v490, 1e-05
        %v523 = vadd.f32 %v491, 1e-05
        %v524 = vadd.f32 %v492, 1e-05
        %v525 = vadd.f32 %v493, 1e-05
        %v526 = vrsqrt.pop %v494
        %v527 = vrsqrt.pop %v495
        %v528 = vrsqrt.pop %v496
        %v529 = vrsqrt.pop %v497
        %v530 = vrsqrt.pop %v498
        %v531 = vrsqrt.pop %v499
        %v532 = vrsqrt.pop %v500
        %v533 = vrsqrt.pop %v501
        %v534 = vrsqrt.pop %v502
        %v535 = vrsqrt.pop %v503
        %v536 = vrsqrt.pop %v504
        %v537 = vrsqrt.pop %v505
        %v538 = vrsqrt.pop %v506
        %v539 = vrsqrt.pop %v507
        %v540 = vrsqrt.pop %v508
        %v541 = vrsqrt.pop %v509
        %v542 = vrsqrt.pop %v510
        %v543 = vrsqrt.pop %v511
        %v544 = vrsqrt.pop %v512
        %v545 = vrsqrt.pop %v513
        %v546 = vrsqrt.pop %v514
        %v547 = vrsqrt.pop %v515
        %v548 = vrsqrt.pop %v516
        %v549 = vrsqrt.pop %v517
        %v550 = vrsqrt.pop %v518
        %v551 = vrsqrt.pop %v519
        %v552 = vrsqrt.pop %v520
        %v553 = vrsqrt.pop %v521
        %v554 = vrsqrt.pop %v522
        %v555 = vrsqrt.pop %v523
        %v556 = vrsqrt.pop %v524
        %v557 = vrsqrt.pop %v525
        %v558 = vmul.f32 %v334, %v526
        %v559 = vmul.f32 %v335, %v527
        %v560 = vmul.f32 %v336, %v528
        %v561 = vmul.f32 %v337, %v529
        %v562 = vmul.f32 %v338, %v530
        %v563 = vmul.f32 %v339, %v531
        %v564 = vmul.f32 %v340, %v532
        %v565 = vmul.f32 %v341, %v533
        %v566 = vmul.f32 %v342, %v534
        %v567 = vmul.f32 %v343, %v535
        %v568 = vmul.f32 %v344, %v536
        %v569 = vmul.f32 %v345, %v537
        %v570 = vmul.f32 %v346, %v538
        %v571 = vmul.f32 %v347, %v539
        %v572 = vmul.f32 %v348, %v540
        %v573 = vmul.f32 %v349, %v541
        %v574 = vmul.f32 %v350, %v542
        %v575 = vmul.f32 %v351, %v543
        %v576 = vmul.f32 %v352, %v544
        %v577 = vmul.f32 %v353, %v545
        %v578 = vmul.f32 %v354, %v546
        %v579 = vmul.f32 %v355, %v547
        %v580 = vmul.f32 %v356, %v548
        %v581 = vmul.f32 %v357, %v549
        %v582 = vmul.f32 %v358, %v550
        %v583 = vmul.f32 %v359, %v551
        %v584 = vmul.f32 %v360, %v552
        %v585 = vmul.f32 %v361, %v553
        %v586 = vmul.f32 %v362, %v554
        %v587 = vmul.f32 %v363, %v555
        %v588 = vmul.f32 %v364, %v556
        %v589 = vmul.f32 %v365, %v557
        %v590 = vld [vmem:[#allocation5] sm:$0xff]
        %v591 = vld [vmem:[#allocation5 + $0x8] sm:$0xff]
        %v592 = vld [vmem:[#allocation5 + $0x10] sm:$0xff]
        %v593 = vld [vmem:[#allocation5 + $0x18] sm:$0xff]
        %v594 = vld [vmem:[#allocation5 + $0x20] sm:$0xff]
        %v595 = vld [vmem:[#allocation5 + $0x28] sm:$0xff]
        %v596 = vld [vmem:[#allocation5 + $0x30] sm:$0xff]
        %v597 = vld [vmem:[#allocation5 + $0x38] sm:$0xff]
        %v598 = vld [vmem:[#allocation5 + $0x40] sm:$0xff]
        %v599 = vld [vmem:[#allocation5 + $0x48] sm:$0xff]
        %v600 = vld [vmem:[#allocation5 + $0x50] sm:$0xff]
        %v601 = vld [vmem:[#allocation5 + $0x58] sm:$0xff]
        %v602 = vld [vmem:[#allocation5 + $0x60] sm:$0xff]
        %v603 = vld [vmem:[#allocation5 + $0x68] sm:$0xff]
        %v604 = vld [vmem:[#allocation5 + $0x70] sm:$0xff]
        %v605 = vld [vmem:[#allocation5 + $0x78] sm:$0xff]
        %v606 = vld [vmem:[%s2] sm:$0x1]
        %v608 = vlaneseq
        %v609 = vshrl.u32 %v608, 7
        %v610 = vsub.s32 0, %v609
        %v611 = vrot.slane %v606, %v610
        %613 = vmatprep.subr.mxu0 0.0
        %614 = vmatpush1.msra.mxu0 %v605
        %615 = vmatprep.subr.mxu0 0.0
        %616 = vmatpush1.msra.mxu0 %v604
        %617 = vmatprep.subr.mxu0 0.0
        %618 = vmatpush1.msra.mxu0 %v603
        %619 = vmatprep.subr.mxu0 0.0
        %620 = vmatpush1.msra.mxu0 %v602
        %621 = vmatprep.subr.mxu0 0.0
        %622 = vmatpush1.msra.mxu0 %v601
        %623 = vmatprep.subr.mxu0 0.0
        %624 = vmatpush1.msra.mxu0 %v600
        %625 = vmatprep.subr.mxu0 0.0
        %626 = vmatpush1.msra.mxu0 %v599
        %627 = vmatprep.subr.mxu0 0.0
        %628 = vmatpush1.msra.mxu0 %v598
        %629 = vmatprep.subr.mxu0 0.0
        %630 = vmatpush1.msra.mxu0 %v597
        %631 = vmatprep.subr.mxu0 0.0
        %632 = vmatpush1.msra.mxu0 %v596
        %633 = vmatprep.subr.mxu0 0.0
        %634 = vmatpush1.msra.mxu0 %v595
        %635 = vmatprep.subr.mxu0 0.0
        %636 = vmatpush1.msra.mxu0 %v594
        %637 = vmatprep.subr.mxu0 0.0
        %638 = vmatpush1.msra.mxu0 %v593
        %639 = vmatprep.subr.mxu0 0.0
        %640 = vmatpush1.msra.mxu0 %v592
        %641 = vmatprep.subr.mxu0 0.0
        %642 = vmatpush1.msra.mxu0 %v591
        %643 = vmatprep.subr.mxu0 0.0
        %644 = vmatpush1.msra.mxu0 %v590
        %645 = vmatprep.subr.mxu0 0.0
        %646 = vmatpush2.msra.mxu0 0.0
        %647 = vmatprep.subr.mxu0 0.0
        %648 = vmatpush2.msra.mxu0 0.0
        %649 = vmatprep.subr.mxu0 0.0
        %650 = vmatpush2.msra.mxu0 0.0
        %651 = vmatprep.subr.mxu0 0.0
        %652 = vmatpush2.msra.mxu0 0.0
        %653 = vmatprep.subr.mxu0 0.0
        %654 = vmatpush2.msra.mxu0 0.0
        %655 = vmatprep.subr.mxu0 0.0
        %656 = vmatpush2.msra.mxu0 0.0
        %657 = vmatprep.subr.mxu0 0.0
        %658 = vmatpush2.msra.mxu0 0.0
        %659 = vmatprep.subr.mxu0 0.0
        %660 = vmatpush2.msra.mxu0 0.0
        %661 = vmatprep.subr.mxu0 0.0
        %662 = vmatpush2.msra.mxu0 0.0
        %663 = vmatprep.subr.mxu0 0.0
        %664 = vmatpush2.msra.mxu0 0.0
        %665 = vmatprep.subr.mxu0 0.0
        %666 = vmatpush2.msra.mxu0 0.0
        %667 = vmatprep.subr.mxu0 0.0
        %668 = vmatpush2.msra.mxu0 0.0
        %669 = vmatprep.subr.mxu0 0.0
        %670 = vmatpush2.msra.mxu0 0.0
        %671 = vmatprep.subr.mxu0 0.0
        %672 = vmatpush2.msra.mxu0 0.0
        %673 = vmatprep.subr.mxu0 0.0
        %674 = vmatpush2.msra.mxu0 0.0
        %675 = vmatprep.subr.mxu0 0.0
        %676 = vmatpush2.msra.mxu0 0.0
        %677 = vmatprep.mubr.f32.mxu0 0.0
        %678 = vmatmul.mubr.f32.gmra.mxu0 %v558
        %v679 = vpop.f32.mrf.mxu0
        %v680 = vadd.f32 %v611, %v679
        %v681 = vpop.f32.mrf.mxu0
        %682 = vmatprep.mubr.f32.mxu0 0.0
        %683 = vmatmul.mubr.f32.gmra.mxu0 %v559
        %v684 = vpop.f32.mrf.mxu0
        %v685 = vadd.f32 %v611, %v684
        %v686 = vpop.f32.mrf.mxu0
        %687 = vmatprep.mubr.f32.mxu0 0.0
        %688 = vmatmul.mubr.f32.gmra.mxu0 %v560
        %v689 = vpop.f32.mrf.mxu0
        %v690 = vadd.f32 %v611, %v689
        %v691 = vpop.f32.mrf.mxu0
        %692 = vmatprep.mubr.f32.mxu0 0.0
        %693 = vmatmul.mubr.f32.gmra.mxu0 %v561
        %v694 = vpop.f32.mrf.mxu0
        %v695 = vadd.f32 %v611, %v694
        %v696 = vpop.f32.mrf.mxu0
        %697 = vmatprep.mubr.f32.mxu0 0.0
        %698 = vmatmul.mubr.f32.gmra.mxu0 %v562
        %v699 = vpop.f32.mrf.mxu0
        %v700 = vadd.f32 %v611, %v699
        %v701 = vpop.f32.mrf.mxu0
        %702 = vmatprep.mubr.f32.mxu0 0.0
        %703 = vmatmul.mubr.f32.gmra.mxu0 %v563
        %v704 = vpop.f32.mrf.mxu0
        %v705 = vadd.f32 %v611, %v704
        %v706 = vpop.f32.mrf.mxu0
        %707 = vmatprep.mubr.f32.mxu0 0.0
        %708 = vmatmul.mubr.f32.gmra.mxu0 %v564
        %v709 = vpop.f32.mrf.mxu0
        %v710 = vadd.f32 %v611, %v709
        %v711 = vpop.f32.mrf.mxu0
        %712 = vmatprep.mubr.f32.mxu0 0.0
        %713 = vmatmul.mubr.f32.gmra.mxu0 %v565
        %v714 = vpop.f32.mrf.mxu0
        %v715 = vadd.f32 %v611, %v714
        %v716 = vpop.f32.mrf.mxu0
        %717 = vmatprep.mubr.f32.mxu0 0.0
        %718 = vmatmul.mubr.f32.gmra.mxu0 %v566
        %v719 = vpop.f32.mrf.mxu0
        %v720 = vadd.f32 %v611, %v719
        %v721 = vpop.f32.mrf.mxu0
        %722 = vmatprep.mubr.f32.mxu0 0.0
        %723 = vmatmul.mubr.f32.gmra.mxu0 %v567
        %v724 = vpop.f32.mrf.mxu0
        %v725 = vadd.f32 %v611, %v724
        %v726 = vpop.f32.mrf.mxu0
        %727 = vmatprep.mubr.f32.mxu0 0.0
        %728 = vmatmul.mubr.f32.gmra.mxu0 %v568
        %v729 = vpop.f32.mrf.mxu0
        %v730 = vadd.f32 %v611, %v729
        %v731 = vpop.f32.mrf.mxu0
        %732 = vmatprep.mubr.f32.mxu0 0.0
        %733 = vmatmul.mubr.f32.gmra.mxu0 %v569
        %v734 = vpop.f32.mrf.mxu0
        %v735 = vadd.f32 %v611, %v734
        %v736 = vpop.f32.mrf.mxu0
        %737 = vmatprep.mubr.f32.mxu0 0.0
        %738 = vmatmul.mubr.f32.gmra.mxu0 %v570
        %v739 = vpop.f32.mrf.mxu0
        %v740 = vadd.f32 %v611, %v739
        %v741 = vpop.f32.mrf.mxu0
        %742 = vmatprep.mubr.f32.mxu0 0.0
        %743 = vmatmul.mubr.f32.gmra.mxu0 %v571
        %v744 = vpop.f32.mrf.mxu0
        %v745 = vadd.f32 %v611, %v744
        %v746 = vpop.f32.mrf.mxu0
        %747 = vmatprep.mubr.f32.mxu0 0.0
        %748 = vmatmul.mubr.f32.gmra.mxu0 %v572
        %v749 = vpop.f32.mrf.mxu0
        %v750 = vadd.f32 %v611, %v749
        %v751 = vpop.f32.mrf.mxu0
        %752 = vmatprep.mubr.f32.mxu0 0.0
        %753 = vmatmul.mubr.f32.gmra.mxu0 %v573
        %v754 = vpop.f32.mrf.mxu0
        %v755 = vadd.f32 %v611, %v754
        %v756 = vpop.f32.mrf.mxu0
        %757 = vmatprep.mubr.f32.mxu0 0.0
        %758 = vmatmul.mubr.f32.gmra.mxu0 %v574
        %v759 = vpop.f32.mrf.mxu0
        %v760 = vadd.f32 %v611, %v759
        %v761 = vpop.f32.mrf.mxu0
        %762 = vmatprep.mubr.f32.mxu0 0.0
        %763 = vmatmul.mubr.f32.gmra.mxu0 %v575
        %v764 = vpop.f32.mrf.mxu0
        %v765 = vadd.f32 %v611, %v764
        %v766 = vpop.f32.mrf.mxu0
        %767 = vmatprep.mubr.f32.mxu0 0.0
        %768 = vmatmul.mubr.f32.gmra.mxu0 %v576
        %v769 = vpop.f32.mrf.mxu0
        %v770 = vadd.f32 %v611, %v769
        %v771 = vpop.f32.mrf.mxu0
        %772 = vmatprep.mubr.f32.mxu0 0.0
        %773 = vmatmul.mubr.f32.gmra.mxu0 %v577
        %v774 = vpop.f32.mrf.mxu0
        %v775 = vadd.f32 %v611, %v774
        %v776 = vpop.f32.mrf.mxu0
        %777 = vmatprep.mubr.f32.mxu0 0.0
        %778 = vmatmul.mubr.f32.gmra.mxu0 %v578
        %v779 = vpop.f32.mrf.mxu0
        %v780 = vadd.f32 %v611, %v779
        %v781 = vpop.f32.mrf.mxu0
        %782 = vmatprep.mubr.f32.mxu0 0.0
        %783 = vmatmul.mubr.f32.gmra.mxu0 %v579
        %v784 = vpop.f32.mrf.mxu0
        %v785 = vadd.f32 %v611, %v784
        %v786 = vpop.f32.mrf.mxu0
        %787 = vmatprep.mubr.f32.mxu0 0.0
        %788 = vmatmul.mubr.f32.gmra.mxu0 %v580
        %v789 = vpop.f32.mrf.mxu0
        %v790 = vadd.f32 %v611, %v789
        %v791 = vpop.f32.mrf.mxu0
        %792 = vmatprep.mubr.f32.mxu0 0.0
        %793 = vmatmul.mubr.f32.gmra.mxu0 %v581
        %v794 = vpop.f32.mrf.mxu0
        %v795 = vadd.f32 %v611, %v794
        %v796 = vpop.f32.mrf.mxu0
        %797 = vmatprep.mubr.f32.mxu0 0.0
        %798 = vmatmul.mubr.f32.gmra.mxu0 %v582
        %v799 = vpop.f32.mrf.mxu0
        %v800 = vadd.f32 %v611, %v799
        %v801 = vpop.f32.mrf.mxu0
        %802 = vmatprep.mubr.f32.mxu0 0.0
        %803 = vmatmul.mubr.f32.gmra.mxu0 %v583
        %v804 = vpop.f32.mrf.mxu0
        %v805 = vadd.f32 %v611, %v804
        %v806 = vpop.f32.mrf.mxu0
        %807 = vmatprep.mubr.f32.mxu0 0.0
        %808 = vmatmul.mubr.f32.gmra.mxu0 %v584
        %v809 = vpop.f32.mrf.mxu0
        %v810 = vadd.f32 %v611, %v809
        %v811 = vpop.f32.mrf.mxu0
        %812 = vmatprep.mubr.f32.mxu0 0.0
        %813 = vmatmul.mubr.f32.gmra.mxu0 %v585
        %v814 = vpop.f32.mrf.mxu0
        %v815 = vadd.f32 %v611, %v814
        %v816 = vpop.f32.mrf.mxu0
        %817 = vmatprep.mubr.f32.mxu0 0.0
        %818 = vmatmul.mubr.f32.gmra.mxu0 %v586
        %v819 = vpop.f32.mrf.mxu0
        %v820 = vadd.f32 %v611, %v819
        %v821 = vpop.f32.mrf.mxu0
        %822 = vmatprep.mubr.f32.mxu0 0.0
        %823 = vmatmul.mubr.f32.gmra.mxu0 %v587
        %v824 = vpop.f32.mrf.mxu0
        %v825 = vadd.f32 %v611, %v824
        %v826 = vpop.f32.mrf.mxu0
        %827 = vmatprep.mubr.f32.mxu0 0.0
        %828 = vmatmul.mubr.f32.gmra.mxu0 %v588
        %v829 = vpop.f32.mrf.mxu0
        %v830 = vadd.f32 %v611, %v829
        %v831 = vpop.f32.mrf.mxu0
        %832 = vmatprep.mubr.f32.mxu0 0.0
        %833 = vmatmul.mubr.f32.gmra.mxu0 %v589
        %v834 = vpop.f32.mrf.mxu0
        %v835 = vadd.f32 %v611, %v834
        %v836 = vpop.f32.mrf.mxu0
        %837 = vdwg.mxu0
        %838 = vst [vmem:[%s203] sm:$0xff] %v680
        %839 = vst [vmem:[%s203 + $0x8] sm:$0xff] %v685
        %840 = vst [vmem:[%s203 + $0x10] sm:$0xff] %v690
        %841 = vst [vmem:[%s203 + $0x18] sm:$0xff] %v695
        %842 = vst [vmem:[%s203 + $0x20] sm:$0xff] %v700
        %843 = vst [vmem:[%s203 + $0x28] sm:$0xff] %v705
        %844 = vst [vmem:[%s203 + $0x30] sm:$0xff] %v710
        %845 = vst [vmem:[%s203 + $0x38] sm:$0xff] %v715
        %846 = vst [vmem:[%s203 + $0x40] sm:$0xff] %v720
        %847 = vst [vmem:[%s203 + $0x48] sm:$0xff] %v725
        %848 = vst [vmem:[%s203 + $0x50] sm:$0xff] %v730
        %849 = vst [vmem:[%s203 + $0x58] sm:$0xff] %v735
        %850 = vst [vmem:[%s203 + $0x60] sm:$0xff] %v740
        %851 = vst [vmem:[%s203 + $0x68] sm:$0xff] %v745
        %852 = vst [vmem:[%s203 + $0x70] sm:$0xff] %v750
        %853 = vst [vmem:[%s203 + $0x78] sm:$0xff] %v755
        %854 = vst [vmem:[%s203 + $0x80] sm:$0xff] %v760
        %855 = vst [vmem:[%s203 + $0x88] sm:$0xff] %v765
        %856 = vst [vmem:[%s203 + $0x90] sm:$0xff] %v770
        %857 = vst [vmem:[%s203 + $0x98] sm:$0xff] %v775
        %858 = vst [vmem:[%s203 + $0xa0] sm:$0xff] %v780
        %859 = vst [vmem:[%s203 + $0xa8] sm:$0xff] %v785
        %860 = vst [vmem:[%s203 + $0xb0] sm:$0xff] %v790
        %861 = vst [vmem:[%s203 + $0xb8] sm:$0xff] %v795
        %862 = vst [vmem:[%s203 + $0xc0] sm:$0xff] %v800
        %863 = vst [vmem:[%s203 + $0xc8] sm:$0xff] %v805
        %864 = vst [vmem:[%s203 + $0xd0] sm:$0xff] %v810
        %865 = vst [vmem:[%s203 + $0xd8] sm:$0xff] %v815
        %866 = vst [vmem:[%s203 + $0xe0] sm:$0xff] %v820
        %867 = vst [vmem:[%s203 + $0xe8] sm:$0xff] %v825
        %868 = vst [vmem:[%s203 + $0xf0] sm:$0xff] %v830
        %869 = vst [vmem:[%s203 + $0xf8] sm:$0xff] %v835
        %s870 = sand.u32 %s97, 1
        %s871 = scalar_lea.sflag [#allocation4], %s870
        %s872 = sand.u32 %s97, 1
        %s873 = smul.addr %s872, 256
        %s874 = scalar_lea.vmem [#allocation7], %s873
        // Predicated region
        $region41: #{tpu_custom_call.1} parent=31 // pred_check
          %p875 = pneg %p107
        $region42: #{tpu_custom_call.1} parent=31 // pred_check_branch
          %877 = sbr.rel (%p875) target = $region44
        $region43: #{tpu_custom_call.1} parent=31 // pred_region
          %s878 = smul.u32 32, %s21
          %s880 = ssub.s32 4096, 4096
          %881 = vsyncadd %s871, %s880
          %s882 = smul.addr %s878, 128
          %s883 = scalar_lea.hbm %s3, %s882
          %s884 = sshll.u32 %s874, 4
          %s885 = int_to_ptr.vmem [resolvable:$true] %s884
          %890 = dma.vmem_to_hbm [thread:$0]  %s885, 4096, %s883, %s871, 128, 128, 8
        $region44: #{tpu_custom_call.1} parent=31 // pred_fallthru
          _
      $region32: #{tpu_custom_call.1} parent=5 // pred_fallthru
        _
      %p891 = scmp.le.s32.totalorder 2, %s16
      // Predicated region
      $region45: #{tpu_custom_call.1} parent=5 // pred_check
        %p892 = pneg %p891
      $region46: #{tpu_custom_call.1} parent=5 // pred_check_branch
        %894 = sbr.rel (%p892) target = $region48
      $region47: #{tpu_custom_call.1} parent=5 // pred_region
        %s895 = ssub.s32 %s16, 2
        // Predicated region
        $region49: #{tpu_custom_call.1} parent=47 // pred_check
          %p896 = pneg %p113
        $region50: #{tpu_custom_call.1} parent=47 // pred_check_branch
          %898 = sbr.rel (%p896) target = $region52
        $region51: #{tpu_custom_call.1} parent=47 // pred_region
          %s899 = sand.u32 %s98, 1
          %s900 = scalar_lea.sflag [#allocation4], %s899
          %s901 = sand.u32 %s98, 1
          %s902 = smul.addr %s901, 256
          %s903 = scalar_lea.vmem [#allocation7], %s902
          %904 = dma.done %s900, 4096
        $region52: #{tpu_custom_call.1} parent=47 // pred_fallthru
          _
      $region48: #{tpu_custom_call.1} parent=5 // pred_fallthru
        _
    $region6: #{tpu_custom_call.1} parent=1 // loop_footer
      %s20 = sadd.s32 1, %s16
    $region7: #{tpu_custom_call.1} parent=1 // loop_footer_branch
      %15 = sbr.rel target = $region3
    $region8: #{tpu_custom_call.1} parent=1 // loop_exit
      _
    %905 = vsyncpa [#allocation3], 1
    %s906 = scalar_lea.sflag [#allocation3], 1
    %907 = vsyncpa %s906, 1
    %908 = vsyncpa [#allocation6], 1
    %909 = vsyncpa [#allocation4], 1
    %s910 = scalar_lea.sflag [#allocation4], 1
    %911 = vsyncpa %s910, 1

</llo_original>
